<compile_context>
chip_gen: v7x
topology: tpu7x:2x2x1
jax: 0.10.0
libtpu: 0.0.40
codegen_flags: <defaults>
</compile_context>

<pallas_src>
import functools

import jax
import jax.numpy as jnp
from jax.experimental import pallas as pl
from jax.experimental.pallas import tpu as pltpu

_MiB = 2 ** 20


def _round_up(x, m):
    return ((x + m - 1) // m) * m


def _mxu_align(dim):
    # v6e/v7x MXU passes are 256 wide; only pay the extra zero padding once the
    # dimension is large enough to plausibly be MXU-bound. 128 is full width on
    # v5e and the lane width everywhere.
    return 256 if dim >= 512 else 128


def _chip_vmem_bytes():
    try:
        return int(pltpu.get_tpu_info().vmem_capacity_bytes)
    except Exception:
        return 64 * _MiB  # conservative (v7x-safe) fallback


def _preselector_kernel(x_ref, bank_ref, sims_ref):
    # x_ref:    (TB, E_pad)   unlabelled artifact embeddings (MXU dtype)
    # bank_ref: (E_pad, TG)   pre-normalized, pre-transposed graph bank
    # sims_ref: (TB, TG)      cosine similarities (lane-dense output)
    x = x_ref[...]

    # MXU matmul in the (bf16 by default) input dtype, f32 accumulation.
    # Bank columns are unit-norm, so dots == <x, g> / ||g||.
    dots = jnp.dot(x, bank_ref[...], preferred_element_type=jnp.float32)

    # 1/||x|| via rsqrt (EUP slot). Zero-norm rows -> similarity exactly 0,
    # matching the module's cosine_similarity zero-norm guard.
    xf = x.astype(jnp.float32)
    xsq = jnp.sum(xf * xf, axis=-1, keepdims=True)
    inv_x = jnp.where(xsq > 0.0, jax.lax.rsqrt(xsq), jnp.float32(0.0))

    sims_ref[...] = (dots * inv_x).astype(sims_ref.dtype)


def make_preselector(bank, *, mxu_dtype=jnp.bfloat16, sims_dtype=jnp.float32,
                     block_b=None):
    """One-time prep of the fixed labeled-graph bank; returns forward(x).

    bank: (G, E) labeled artifact-graph embeddings (fixed / deterministic).
    forward(x): x is (B, E); returns (sims (B,G), best (B,1), idx (B,1) int32).
    """
    bank = jnp.asarray(bank)
    G, E = bank.shape
    mxu_dtype = jnp.dtype(mxu_dtype)
    sims_dtype = jnp.dtype(sims_dtype)
    itemsize = mxu_dtype.itemsize
    sims_isz = sims_dtype.itemsize
    # packed sublane count: 8 (f32), 16 (bf16), 32 (int8)
    sub = max(8, 32 // itemsize)

    E_pad = _round_up(E, _mxu_align(E))
    G_pad = _round_up(G, _mxu_align(G))

    vmem_cap = _chip_vmem_bytes()
    vmem_budget = max(16 * _MiB, min(vmem_cap, 128 * _MiB) - 16 * _MiB)

    # Decide (once) whether the whole bank stays resident in VMEM (single
    # buffer) or must be streamed along a G grid axis. Sized against the
    # largest B tile ever used (512 rows).
    tb_max = 512

    def _working_set(tg, bank_bufs):
        return (bank_bufs * E_pad * tg * itemsize        # bank buffer(s)
                + 2 * tb_max * E_pad * itemsize          # x tiles (dbl-buffered)
                + 2 * tb_max * tg * sims_isz)            # sims tiles

    if _working_set(G_pad, 1) <= vmem_budget:
        bank_resident = True
        block_g = G_pad
    else:
        # Large banks: stream double-buffered (E_pad, block_g) bank tiles
        # along an extra "parallel" grid axis.
        bank_resident = False
        block_g = max(256, G_pad // 2)
        while block_g > 256 and _working_set(block_g, 2) > vmem_budget:
            block_g //= 2
        block_g = _round_up(block_g, 256)
        G_pad = _round_up(G_pad, block_g)

    # --- one-time bank prep (hoisted out of the per-call path) --------------
    bank_f32 = bank.astype(jnp.float32)
    gsq = jnp.sum(bank_f32 * bank_f32, axis=-1, keepdims=True)
    bank_n = bank_f32 * jnp.where(gsq > 0.0, jax.lax.rsqrt(gsq), 0.0)   # (G, E)
    bank_p = (jnp.zeros((E_pad, G_pad), mxu_dtype)
              .at[:E, :G].set(bank_n.T.astype(mxu_dtype)))              # (E, G)
    bank_p = jax.block_until_ready(bank_p)

    @functools.partial(jax.jit, static_argnames=("tb",))
    def _run(x, bank_arr, tb):
        B = x.shape[0]
        B_pad = _round_up(B, tb)
        nb = B_pad // tb
        ng = G_pad // block_g

        x_p = (jnp.zeros((B_pad, E_pad), mxu_dtype)
               .at[:B, :E].set(x.astype(mxu_dtype)))

        if bank_resident:
            grid = (nb,)
            in_specs = [
                pl.BlockSpec((tb, E_pad), lambda i: (i, 0)),
                # Constant bank: whole array resident in VMEM, single buffer
                # (the Buffered(1) intent - no 2x double-buffer reservation).
                pl.BlockSpec(memory_space=pltpu.MemorySpace.VMEM),
            ]
            out_specs = pl.BlockSpec((tb, G_pad), lambda i: (i, 0))
            dims = ("parallel",)
            bank_buf_bytes = E_pad * G_pad * itemsize
        else:
            grid = (nb, ng)
            in_specs = [
                pl.BlockSpec((tb, E_pad), lambda i, j: (i, 0)),
                pl.BlockSpec((E_pad, block_g), lambda i, j: (0, j)),
            ]
            out_specs = pl.BlockSpec((tb, block_g), lambda i, j: (i, j))
            dims = ("parallel", "parallel")
            bank_buf_bytes = 2 * E_pad * block_g * itemsize

        # VMEM limit: actual working set with margin, clamped to chip VMEM.
        need = (bank_buf_bytes
                + 2 * tb * E_pad * itemsize
                + 2 * tb * block_g * sims_isz
                + 2 * _MiB)
        vmem_limit = int(min(max(2 * need, 16 * _MiB), vmem_cap - 8 * _MiB))

        cost = pl.CostEstimate(
            flops=2 * B_pad * G_pad * E_pad,
            transcendentals=B_pad,
            bytes_accessed=(B_pad * E_pad * itemsize
                            + E_pad * G_pad * itemsize
                            + B_pad * G_pad * sims_isz),
        )

        sims_p = pl.pallas_call(
            _preselector_kernel,
            out_shape=jax.ShapeDtypeStruct((B_pad, G_pad), sims_dtype),
            grid=grid,
            in_specs=in_specs,
            out_specs=out_specs,
            compiler_params=pltpu.CompilerParams(
                dimension_semantics=dims,
                vmem_limit_bytes=vmem_limit,
            ),
            cost_estimate=cost,
        )(x_p, bank_arr)

        # Kernel emits only the lane-dense sims tile; the tiny (B, G)
        # selection (max + first-argmax) runs here in the jitted wrapper.
        sims = sims_p[:B, :G]
        best = jnp.max(sims, axis=-1, keepdims=True)
        idx = jnp.argmax(sims, axis=-1).astype(jnp.int32)[:, None]
        return sims, best, idx

    def forward(x):
        x = jnp.asarray(x)
        if x.ndim != 2 or x.shape[1] != E:
            raise ValueError(f"expected (B, {E}) input, got {x.shape}")
        B = x.shape[0]
        if block_b is not None:
            tb = block_b
        else:
            # one big tile for small B (fewest grid steps); 512-row tiles for
            # large B (keeps v7x's 2 TensorCores busy via "parallel" steps
            # while staying at high DMA/MXU efficiency on all generations).
            tb = min(_round_up(B, sub), tb_max)
        tb = max(sub, _round_up(tb, sub))
        return _run(x, bank_p, tb=tb)

    return forward


if __name__ == "__main__":
    # small shapes consistent with the module (embedding_size default 300)
    B, E, G = 32, 300, 20

    key = jax.random.PRNGKey(0)
    kx, kb = jax.random.split(key)
    x = jax.random.normal(kx, (B, E), dtype=jnp.float32)
    # deterministic "labeled artifact graph" embedding bank (synthetic params)
    bank = jax.random.normal(kb, (G, E), dtype=jnp.float32)
    # exercise both zero-norm guards
    x = x.at[0].set(0.0)
    bank = bank.at[3].set(0.0)

    # one-time bank prep, then per-call forward (bf16 MXU path by default)
    forward = make_preselector(bank)
    sims, best, idx = forward(x)
    jax.block_until_ready((sims, best, idx))

    # pure-JAX reference (module's cosine_similarity semantics)
    xn = jnp.linalg.norm(x, axis=-1, keepdims=True)
    gn = jnp.linalg.norm(bank, axis=-1, keepdims=True).T
    denom = xn * gn
    ref_sims = jnp.where(denom == 0.0, 0.0, (x @ bank.T) / denom)
    ref_best = jnp.max(ref_sims, axis=-1)

    assert sims.shape == (B, G) and best.shape == (B, 1) and idx.shape == (B, 1)
    # bf16 MXU inputs -> relaxed tolerance (f32 accumulation keeps error small)
    assert jnp.allclose(sims, ref_sims, atol=2e-2)
    assert jnp.allclose(best[:, 0], ref_best, atol=2e-2)
    # chosen index must (approximately) attain the reference maximum
    chosen = jnp.take_along_axis(ref_sims, idx, axis=1)[:, 0]
    assert jnp.allclose(chosen, ref_best, atol=5e-2)
    assert jnp.all((idx[:, 0] >= 0) & (idx[:, 0] < G))
    # zero-norm artifact row -> all similarities exactly 0
    assert jnp.all(sims[0] == 0.0) and best[0, 0] == 0.0
    # zero-norm graph -> similarity exactly 0 for every artifact
    assert jnp.all(sims[:, 3] == 0.0)

    # f32 MXU path keeps the original tight tolerance
    forward_f32 = make_preselector(bank, mxu_dtype=jnp.float32)
    sims32, best32, idx32 = forward_f32(x)
    jax.block_until_ready((sims32, best32, idx32))
    assert jnp.allclose(sims32, ref_sims, atol=2e-4)
    assert jnp.allclose(best32[:, 0], ref_best, atol=2e-4)

    print("KERNEL_OK")
</pallas_src>

<mosaic_0001>
module attributes {stable_mosaic.version = 11 : i64} {
  func.func @_preselector_kernel(%arg0: i32, %arg1: memref<32x384xbf16, #tpu.memory_space<vmem>>, %arg2: memref<384x128xbf16, #tpu.memory_space<vmem>>, %arg3: memref<32x128xf32, #tpu.memory_space<vmem>>) attributes {dimension_semantics = [#tpu.dimension_semantics<parallel>], iteration_bounds = array<i64: 1>, scalar_prefetch = 0 : i64, scratch_operands = 0 : i64, tpu.core_type = #tpu.core_type<tc>, window_params = [{transform_indices = @transform_0, window_bounds = array<i64: 32, 384>}, {pipeline_mode = #tpu.pipeline_mode<synchronous>, transform_indices = @transform_1, window_bounds = array<i64: 384, 128>}, {transform_indices = @transform_2, window_bounds = array<i64: 32, 128>}]} {
    %c0 = arith.constant 0 : index
    %c0_0 = arith.constant 0 : index
    %0 = vector.load %arg1[%c0, %c0_0] : memref<32x384xbf16, #tpu.memory_space<vmem>>, vector<32x384xbf16>
    %c0_1 = arith.constant 0 : index
    %c0_2 = arith.constant 0 : index
    %1 = vector.load %arg2[%c0_1, %c0_2] : memref<384x128xbf16, #tpu.memory_space<vmem>>, vector<384x128xbf16>
    %cst = arith.constant dense<0.000000e+00> : vector<32x128xf32>
    %2 = tpu.matmul %0, %1, %cst {dimension_numbers = #tpu.dot_dimension_numbers<[1], [0], [0], [1], [0, 0, 1, 1], [], []>} : vector<32x384xbf16>, vector<384x128xbf16>, vector<32x128xf32> -> vector<32x128xf32>
    %3 = arith.extf %0 : vector<32x384xbf16> to vector<32x384xf32>
    %4 = arith.mulf %3, %3 : vector<32x384xf32>
    %cst_3 = arith.constant dense<0.000000e+00> : vector<32xf32>
    %5 = vector.multi_reduction <add>, %4, %cst_3 [1] : vector<32x384xf32> to vector<32xf32>
    %6 = vector.shape_cast %5 : vector<32xf32> to vector<32x1xf32>
    %cst_4 = arith.constant 0.000000e+00 : f32
    %7 = vector.broadcast %cst_4 : f32 to vector<32x1xf32>
    %8 = arith.cmpf ogt, %6, %7 : vector<32x1xf32>
    %9 = math.rsqrt %6 : vector<32x1xf32>
    %cst_5 = arith.constant 0.000000e+00 : f32
    %10 = vector.broadcast %cst_5 : f32 to vector<32x1xf32>
    %11 = arith.select %8, %9, %10 : vector<32x1xi1>, vector<32x1xf32>
    %12 = vector.broadcast %11 : vector<32x1xf32> to vector<32x128xf32>
    %13 = arith.mulf %2, %12 : vector<32x128xf32>
    %c0_6 = arith.constant 0 : index
    %c0_7 = arith.constant 0 : index
    %14 = vector.load %arg3[%c0_6, %c0_7] : memref<32x128xf32, #tpu.memory_space<vmem>>, vector<32x128xf32>
    tpu.vector_store %arg3[%c0_6, %c0_7], %13 {strides = array<i32>} : memref<32x128xf32, #tpu.memory_space<vmem>>, vector<32x128xf32>,
    return
  }
  func.func @transform_0(%arg0: i32) -> (i32, i32) {
    %c0_i32 = arith.constant 0 : i32
    %c0_i32_0 = arith.constant 0 : i32
    return %arg0, %c0_i32 : i32, i32
  }
  func.func @transform_1(%arg0: i32) -> (i32, i32) {
    %c0_i32 = arith.constant 0 : i32
    %c0_i32_0 = arith.constant 0 : i32
    %c0_i32_1 = arith.constant 0 : i32
    return %c0_i32, %c0_i32_0 : i32, i32
  }
  func.func @transform_2(%arg0: i32) -> (i32, i32) {
    %c0_i32 = arith.constant 0 : i32
    %c0_i32_0 = arith.constant 0 : i32
    return %arg0, %c0_i32 : i32, i32
  }
}

</mosaic_0001>

<llo_original>
// kernel: _run.1
$region0: #{_run.1}
  #allocation0 [shape = 'u32[]', space=smem, size = 0x4, offset = 0x4, fixed_abs, tag = 'smem constant byte address 0x4 - core index']
  #allocation1 [shape = 'u32[144,128]{1,0:T(1,128)}', space=vmem, size = 0x12000, scoped, tag = 'internal scratch']
  %s0 = inlined_call_operand.vmem [shape: bf16[32,384], index: 0, kind: input, shape index: {}]
  %s1 = inlined_call_operand.vmem [shape: bf16[384,128], index: 1, kind: input, shape index: {}]
  %s2 = inlined_call_operand.vmem [shape: f32[32,128], index: 2, kind: output, shape index: {}]
  %s3 = sld [smem:[#allocation0]]
  $region18: #{_run.1} parent=0
    _
  %s5 = ssub.s32 1, %s3
  %s6 = scalar_select 0, %s5, %s3
  // Predicated region
  $region2: #{_run.1} parent=0 // pred_check
    _
  $region3: #{_run.1} parent=0 // pred_check_branch
    %8 = sbr.rel (0) target = $region5
  $region4: #{_run.1} parent=0 // pred_region
    _
  $region5: #{_run.1} parent=0 // pred_fallthru
    _
  // Predicated region
  $region6: #{_run.1} parent=0 // pred_check
    _
  $region7: #{_run.1} parent=0 // pred_check_branch
    %10 = sbr.rel (0) target = $region9
  $region8: #{_run.1} parent=0 // pred_region
    _
  $region9: #{_run.1} parent=0 // pred_fallthru
    _
  %v12 = vld [vmem:[%s0] sm:$0xff]
  %v13 = vld [vmem:[%s0 + $0x8] sm:$0xf]
  %v14 = vld [vmem:[%s0 + $0xc] sm:$0xff]
  %v15 = vld [vmem:[%s0 + $0x14] sm:$0xf]
  %v16 = vld [vmem:[%s0 + $0x18] sm:$0xff]
  %v17 = vld [vmem:[%s0 + $0x20] sm:$0xf]
  %v18 = vld [vmem:[%s0 + $0x24] sm:$0xff]
  %v19 = vld [vmem:[%s0 + $0x2c] sm:$0xf]
  %v20 = vld [vmem:[%s1] sm:$0xf]
  %v21 = vld [vmem:[%s1 + $0x4] sm:$0xf]
  %v22 = vld [vmem:[%s1 + $0x8] sm:$0xf]
  %v23 = vld [vmem:[%s1 + $0xc] sm:$0xf]
  %v24 = vld [vmem:[%s1 + $0x10] sm:$0xf]
  %v25 = vld [vmem:[%s1 + $0x14] sm:$0xf]
  %v26 = vld [vmem:[%s1 + $0x18] sm:$0xf]
  %v27 = vld [vmem:[%s1 + $0x1c] sm:$0xf]
  %v28 = vld [vmem:[%s1 + $0x20] sm:$0xf]
  %v29 = vld [vmem:[%s1 + $0x24] sm:$0xf]
  %v30 = vld [vmem:[%s1 + $0x28] sm:$0xf]
  %v31 = vld [vmem:[%s1 + $0x2c] sm:$0xf]
  %v32 = vld [vmem:[%s1 + $0x30] sm:$0xf]
  %v33 = vld [vmem:[%s1 + $0x34] sm:$0xf]
  %v34 = vld [vmem:[%s1 + $0x38] sm:$0xf]
  %v35 = vld [vmem:[%s1 + $0x3c] sm:$0xf]
  %v36 = vld [vmem:[%s1 + $0x40] sm:$0xf]
  %v37 = vld [vmem:[%s1 + $0x44] sm:$0xf]
  %v38 = vld [vmem:[%s1 + $0x48] sm:$0xf]
  %v39 = vld [vmem:[%s1 + $0x4c] sm:$0xf]
  %v40 = vld [vmem:[%s1 + $0x50] sm:$0xf]
  %v41 = vld [vmem:[%s1 + $0x54] sm:$0xf]
  %v42 = vld [vmem:[%s1 + $0x58] sm:$0xf]
  %v43 = vld [vmem:[%s1 + $0x5c] sm:$0xf]
  %v44 = vld [vmem:[%s1 + $0x60] sm:$0xf]
  %v45 = vld [vmem:[%s1 + $0x64] sm:$0xf]
  %v46 = vld [vmem:[%s1 + $0x68] sm:$0xf]
  %v47 = vld [vmem:[%s1 + $0x6c] sm:$0xf]
  %v48 = vld [vmem:[%s1 + $0x70] sm:$0xf]
  %v49 = vld [vmem:[%s1 + $0x74] sm:$0xf]
  %v50 = vld [vmem:[%s1 + $0x78] sm:$0xf]
  %v51 = vld [vmem:[%s1 + $0x7c] sm:$0xf]
  %v52 = vld [vmem:[%s1 + $0x80] sm:$0xf]
  %v53 = vld [vmem:[%s1 + $0x84] sm:$0xf]
  %v54 = vld [vmem:[%s1 + $0x88] sm:$0xf]
  %v55 = vld [vmem:[%s1 + $0x8c] sm:$0xf]
  %v56 = vld [vmem:[%s1 + $0x90] sm:$0xf]
  %v57 = vld [vmem:[%s1 + $0x94] sm:$0xf]
  %v58 = vld [vmem:[%s1 + $0x98] sm:$0xf]
  %v59 = vld [vmem:[%s1 + $0x9c] sm:$0xf]
  %v60 = vld [vmem:[%s1 + $0xa0] sm:$0xf]
  %v61 = vld [vmem:[%s1 + $0xa4] sm:$0xf]
  %v62 = vld [vmem:[%s1 + $0xa8] sm:$0xf]
  %v63 = vld [vmem:[%s1 + $0xac] sm:$0xf]
  %v64 = vld [vmem:[%s1 + $0xb0] sm:$0xf]
  %v65 = vld [vmem:[%s1 + $0xb4] sm:$0xf]
  %v66 = vld [vmem:[%s1 + $0xb8] sm:$0xf]
  %v67 = vld [vmem:[%s1 + $0xbc] sm:$0xf]
  %v76 = vunpack.c.l.b16 %v12
  %v77 = vunpack.c.h.b16 %v12
  %v78 = vunpack.c.l.b16 %v13
  %v79 = vunpack.c.l.b16 %v14
  %v80 = vunpack.c.h.b16 %v14
  %v81 = vunpack.c.l.b16 %v15
  %v82 = vunpack.c.l.b16 %v16
  %v83 = vunpack.c.h.b16 %v16
  %v84 = vunpack.c.l.b16 %v17
  %v85 = vunpack.c.l.b16 %v18
  %v86 = vunpack.c.h.b16 %v18
  %v87 = vunpack.c.l.b16 %v19
  %v88 = vpack.c.b16 %v79, %v76
  %v89 = vpack.c.b16 %v80, %v77
  %v90 = vpack.c.b16 %v81, %v78
  %v91 = vpack.c.b16 %v85, %v82
  %v92 = vpack.c.b16 %v86, %v83
  %v93 = vpack.c.b16 %v87, %v84
  %v148 = vunpack.c.l.b16 %v20
  %v149 = vunpack.c.l.b16 %v21
  %v150 = vunpack.c.l.b16 %v22
  %v151 = vunpack.c.l.b16 %v23
  %v152 = vunpack.c.l.b16 %v24
  %v153 = vunpack.c.l.b16 %v25
  %v154 = vunpack.c.l.b16 %v26
  %v155 = vunpack.c.l.b16 %v27
  %v156 = vunpack.c.l.b16 %v28
  %v157 = vunpack.c.l.b16 %v29
  %v158 = vunpack.c.l.b16 %v30
  %v159 = vunpack.c.l.b16 %v31
  %v160 = vunpack.c.l.b16 %v32
  %v161 = vunpack.c.l.b16 %v33
  %v162 = vunpack.c.l.b16 %v34
  %v163 = vunpack.c.l.b16 %v35
  %v164 = vunpack.c.l.b16 %v36
  %v165 = vunpack.c.l.b16 %v37
  %v166 = vunpack.c.l.b16 %v38
  %v167 = vunpack.c.l.b16 %v39
  %v168 = vunpack.c.l.b16 %v40
  %v169 = vunpack.c.l.b16 %v41
  %v170 = vunpack.c.l.b16 %v42
  %v171 = vunpack.c.l.b16 %v43
  %v172 = vunpack.c.l.b16 %v44
  %v173 = vunpack.c.l.b16 %v45
  %v174 = vunpack.c.l.b16 %v46
  %v175 = vunpack.c.l.b16 %v47
  %v176 = vunpack.c.l.b16 %v48
  %v177 = vunpack.c.l.b16 %v49
  %v178 = vunpack.c.l.b16 %v50
  %v179 = vunpack.c.l.b16 %v51
  %v180 = vunpack.c.l.b16 %v52
  %v181 = vunpack.c.l.b16 %v53
  %v182 = vunpack.c.l.b16 %v54
  %v183 = vunpack.c.l.b16 %v55
  %v184 = vunpack.c.l.b16 %v56
  %v185 = vunpack.c.l.b16 %v57
  %v186 = vunpack.c.l.b16 %v58
  %v187 = vunpack.c.l.b16 %v59
  %v188 = vunpack.c.l.b16 %v60
  %v189 = vunpack.c.l.b16 %v61
  %v190 = vunpack.c.l.b16 %v62
  %v191 = vunpack.c.l.b16 %v63
  %v192 = vunpack.c.l.b16 %v64
  %v193 = vunpack.c.l.b16 %v65
  %v194 = vunpack.c.l.b16 %v66
  %v195 = vunpack.c.l.b16 %v67
  %v196 = vpack.c.b16 %v149, %v148
  %v197 = vpack.c.b16 %v151, %v150
  %v198 = vpack.c.b16 %v153, %v152
  %v199 = vpack.c.b16 %v155, %v154
  %v200 = vpack.c.b16 %v157, %v156
  %v201 = vpack.c.b16 %v159, %v158
  %v202 = vpack.c.b16 %v161, %v160
  %v203 = vpack.c.b16 %v163, %v162
  %v204 = vpack.c.b16 %v165, %v164
  %v205 = vpack.c.b16 %v167, %v166
  %v206 = vpack.c.b16 %v169, %v168
  %v207 = vpack.c.b16 %v171, %v170
  %v208 = vpack.c.b16 %v173, %v172
  %v209 = vpack.c.b16 %v175, %v174
  %v210 = vpack.c.b16 %v177, %v176
  %v211 = vpack.c.b16 %v179, %v178
  %v212 = vpack.c.b16 %v181, %v180
  %v213 = vpack.c.b16 %v183, %v182
  %v214 = vpack.c.b16 %v185, %v184
  %v215 = vpack.c.b16 %v187, %v186
  %v216 = vpack.c.b16 %v189, %v188
  %v217 = vpack.c.b16 %v191, %v190
  %v218 = vpack.c.b16 %v193, %v192
  %v219 = vpack.c.b16 %v195, %v194
  %244 = vmatprep.subr.bf16.mxu0 0
  %245 = vmatpush1.bf16.msra.mxu0 %v196
  %246 = vmatprep.subr.bf16.mxu0 0
  %247 = vmatpush1.bf16.msra.mxu0 %v197
  %248 = vmatprep.subr.bf16.mxu0 0
  %249 = vmatpush1.bf16.msra.mxu0 %v198
  %250 = vmatprep.subr.bf16.mxu0 0
  %251 = vmatpush1.bf16.msra.mxu0 %v199
  %252 = vmatprep.subr.bf16.mxu0 0
  %253 = vmatpush1.bf16.msra.mxu0 %v200
  %254 = vmatprep.subr.bf16.mxu0 0
  %255 = vmatpush1.bf16.msra.mxu0 %v201
  %256 = vmatprep.subr.bf16.mxu0 0
  %257 = vmatpush1.bf16.msra.mxu0 %v202
  %258 = vmatprep.subr.bf16.mxu0 0
  %259 = vmatpush1.bf16.msra.mxu0 %v203
  %260 = vmatprep.subr.bf16.mxu0 0
  %261 = vmatpush1.bf16.msra.mxu0 %v204
  %262 = vmatprep.subr.bf16.mxu0 0
  %263 = vmatpush1.bf16.msra.mxu0 %v205
  %264 = vmatprep.subr.bf16.mxu0 0
  %265 = vmatpush1.bf16.msra.mxu0 %v206
  %266 = vmatprep.subr.bf16.mxu0 0
  %267 = vmatpush1.bf16.msra.mxu0 %v207
  %268 = vmatprep.subr.bf16.mxu0 0
  %269 = vmatpush1.bf16.msra.mxu0 %v208
  %270 = vmatprep.subr.bf16.mxu0 0
  %271 = vmatpush1.bf16.msra.mxu0 %v209
  %272 = vmatprep.subr.bf16.mxu0 0
  %273 = vmatpush1.bf16.msra.mxu0 %v210
  %274 = vmatprep.subr.bf16.mxu0 0
  %275 = vmatpush1.bf16.msra.mxu0 %v211
  %276 = vmatprep.mubr.bf16.mxu0 %v89
  %277 = vmatmul.mubr.bf16.gmra.mrb[0].mxu0 %v88
  %v278 = vpop.f32.mrb[0].mxu0
  %v279 = vadd.f32 0.0, %v278
  %v280 = vpop.f32.mrb[0].mxu0
  %v281 = vpop.f32.mrb[0].mxu0
  %v282 = vadd.f32 0.0, %v281
  %v283 = vpop.f32.mrb[0].mxu0
  %284 = vmatprep.mubr.bf16.mxu0 %v92
  %285 = vmatmul.mubr.bf16.gmra.mrb[0].mxu0 %v91
  %v286 = vpop.f32.mrb[0].mxu0
  %v287 = vadd.f32 0.0, %v286
  %v288 = vpop.f32.mrb[0].mxu0
  %v289 = vpop.f32.mrb[0].mxu0
  %v290 = vadd.f32 0.0, %v289
  %v291 = vpop.f32.mrb[0].mxu0
  %292 = vdwg.mxu0
  %293 = vmatprep.subr.bf16.mxu0 0
  %294 = vmatpush1.bf16.msra.mxu0 %v212
  %295 = vmatprep.subr.bf16.mxu0 0
  %296 = vmatpush1.bf16.msra.mxu0 %v213
  %297 = vmatprep.subr.bf16.mxu0 0
  %298 = vmatpush1.bf16.msra.mxu0 %v214
  %299 = vmatprep.subr.bf16.mxu0 0
  %300 = vmatpush1.bf16.msra.mxu0 %v215
  %301 = vmatprep.subr.bf16.mxu0 0
  %302 = vmatpush1.bf16.msra.mxu0 %v216
  %303 = vmatprep.subr.bf16.mxu0 0
  %304 = vmatpush1.bf16.msra.mxu0 %v217
  %305 = vmatprep.subr.bf16.mxu0 0
  %306 = vmatpush1.bf16.msra.mxu0 %v218
  %307 = vmatprep.subr.bf16.mxu0 0
  %308 = vmatpush1.bf16.msra.mxu0 %v219
  %309 = vmatprep.subr.bf16.mxu0 0
  %310 = vmatpush1.bf16.msra.mxu0 0
  %311 = vmatprep.subr.bf16.mxu0 0
  %312 = vmatpush1.bf16.msra.mxu0 0
  %313 = vmatprep.subr.bf16.mxu0 0
  %314 = vmatpush1.bf16.msra.mxu0 0
  %315 = vmatprep.subr.bf16.mxu0 0
  %316 = vmatpush1.bf16.msra.mxu0 0
  %317 = vmatprep.subr.bf16.mxu0 0
  %318 = vmatpush1.bf16.msra.mxu0 0
  %319 = vmatprep.subr.bf16.mxu0 0
  %320 = vmatpush1.bf16.msra.mxu0 0
  %321 = vmatprep.subr.bf16.mxu0 0
  %322 = vmatpush1.bf16.msra.mxu0 0
  %323 = vmatprep.subr.bf16.mxu0 0
  %324 = vmatpush1.bf16.msra.mxu0 0
  %325 = vmatprep.mubr.bf16.mxu0 0
  %326 = vmatmul.mubr.bf16.gmra.mrb[0].mxu0 %v90
  %v327 = vpop.f32.mrb[0].mxu0
  %v328 = vadd.f32 %v279, %v327
  %v329 = vpop.f32.mrb[0].mxu0
  %v330 = vpop.f32.mrb[0].mxu0
  %v331 = vadd.f32 %v282, %v330
  %v332 = vpop.f32.mrb[0].mxu0
  %333 = vmatprep.mubr.bf16.mxu0 0
  %334 = vmatmul.mubr.bf16.gmra.mrb[0].mxu0 %v93
  %v335 = vpop.f32.mrb[0].mxu0
  %v336 = vadd.f32 %v287, %v335
  %v337 = vpop.f32.mrb[0].mxu0
  %v338 = vpop.f32.mrb[0].mxu0
  %v339 = vadd.f32 %v290, %v338
  %v340 = vpop.f32.mrb[0].mxu0
  %341 = vdwg.mxu0
  %v342 = vunpack.c.l.bf16 %v12
  %v343 = vunpack.c.h.bf16 %v12
  %v344 = vunpack.c.l.bf16 %v13
  %v345 = vunpack.c.l.bf16 %v14
  %v346 = vunpack.c.h.bf16 %v14
  %v347 = vunpack.c.l.bf16 %v15
  %v348 = vunpack.c.l.bf16 %v16
  %v349 = vunpack.c.h.bf16 %v16
  %v350 = vunpack.c.l.bf16 %v17
  %v351 = vunpack.c.l.bf16 %v18
  %v352 = vunpack.c.h.bf16 %v18
  %v353 = vunpack.c.l.bf16 %v19
  %v354 = vmul.f32 %v342, %v342
  %v355 = vmul.f32 %v343, %v343
  %v356 = vmul.f32 %v344, %v344
  %v357 = vmul.f32 %v345, %v345
  %v358 = vmul.f32 %v346, %v346
  %v359 = vmul.f32 %v347, %v347
  %v360 = vmul.f32 %v348, %v348
  %v361 = vmul.f32 %v349, %v349
  %v362 = vmul.f32 %v350, %v350
  %v363 = vmul.f32 %v351, %v351
  %v364 = vmul.f32 %v352, %v352
  %v365 = vmul.f32 %v353, %v353
  %v366 = vadd.f32 %v354, %v355
  %v367 = vadd.f32 %v366, %v356
  %368 = vadd.xlane.f32.xlu0 %v367
  %v369 = vpop.xlane.xlu0 %368
  %v370 = vadd.f32 %v357, %v358
  %v371 = vadd.f32 %v370, %v359
  %372 = vadd.xlane.f32.xlu0 %v371
  %v373 = vpop.xlane.xlu0 %372
  %v374 = vadd.f32 %v360, %v361
  %v375 = vadd.f32 %v374, %v362
  %376 = vadd.xlane.f32.xlu0 %v375
  %v377 = vpop.xlane.xlu0 %376
  %v378 = vadd.f32 %v363, %v364
  %v379 = vadd.f32 %v378, %v365
  %380 = vadd.xlane.f32.xlu0 %v379
  %v381 = vpop.xlane.xlu0 %380
  %vm382 = vcmp.gt.f32.partialorder %v369, 0.0
  %vm383 = vcmp.gt.f32.partialorder %v373, 0.0
  %vm384 = vcmp.gt.f32.partialorder %v377, 0.0
  %vm385 = vcmp.gt.f32.partialorder %v381, 0.0
  %v386 = vrsqrt.pop %v369
  %v387 = vrsqrt.pop %v373
  %v388 = vrsqrt.pop %v377
  %v389 = vrsqrt.pop %v381
  %v390 = vsel %vm382, %v386, 0.0
  %v391 = vsel %vm383, %v387, 0.0
  %v392 = vsel %vm384, %v388, 0.0
  %v393 = vsel %vm385, %v389, 0.0
  %v394 = vmul.f32 %v328, %v390
  %v395 = vmul.f32 %v331, %v391
  %v396 = vmul.f32 %v336, %v392
  %v397 = vmul.f32 %v339, %v393
  %398 = vst [vmem:[%s2] sm:$0xff] %v394
  %399 = vst [vmem:[%s2 + $0x8] sm:$0xff] %v395
  %400 = vst [vmem:[%s2 + $0x10] sm:$0xff] %v396
  %401 = vst [vmem:[%s2 + $0x18] sm:$0xff] %v397
  // Predicated region
  $region10: #{_run.1} parent=0 // pred_check
    _
  $region11: #{_run.1} parent=0 // pred_check_branch
    %403 = sbr.rel (0) target = $region13
  $region12: #{_run.1} parent=0 // pred_region
    _
  $region13: #{_run.1} parent=0 // pred_fallthru
    _
  // Predicated region
  $region14: #{_run.1} parent=0 // pred_check
    _
  $region15: #{_run.1} parent=0 // pred_check_branch
    %405 = sbr.rel (0) target = $region17
  $region16: #{_run.1} parent=0 // pred_region
    _
  $region17: #{_run.1} parent=0 // pred_fallthru
    _

</llo_original>
